<compile_context>
chip_gen: v6e
topology: v6e:2x2x1
jax: 0.10.0
libtpu: 0.0.40
codegen_flags: <defaults>
</compile_context>

<pallas_src>
import math

import jax
import jax.numpy as jnp
from jax.experimental import pallas as pl
from jax.experimental.pallas import tpu as pltpu


def _cdiv(a, b):
    return (a + b - 1) // b


def _round_up(v, m):
    return _cdiv(v, m) * m


def _lora_kernel(x_ref, at_ref, bt_ref, o_ref, h_ref):
    """Main path.  Grid (M/tm, N/tn); h is cached in VMEM across the N axis."""
    j = pl.program_id(1)

    @pl.when(j == 0)
    def _():
        # x @ (A^T * scaling); scaling was folded into at_ref by the wrapper.
        h = jnp.dot(x_ref[...], at_ref[...], preferred_element_type=jnp.float32)
        h_ref[...] = h.astype(h_ref.dtype)

    tn = o_ref.shape[-1]
    col = pl.multiple_of(j * tn, 128)
    y = jnp.dot(h_ref[...], bt_ref[:, pl.ds(col, tn)],
                preferred_element_type=jnp.float32)
    o_ref[...] = y.astype(o_ref.dtype)


def _lora_apply_b_kernel(h_ref, bt_ref, o_ref):
    """Decode path.  h precomputed in XLA; only N is tiled (fully parallel)."""
    y = jnp.dot(h_ref[...], bt_ref[...], preferred_element_type=jnp.float32)
    o_ref[...] = y.astype(o_ref.dtype)


def lora_forward(x, a_weight, b_weight, *, lora_alpha=8.0, compute_dtype=None,
                 tm=1024, tn=2048):
    """x: (..., input_dim); a_weight: (r, input_dim); b_weight: (output_dim, r)."""
    r, input_dim = a_weight.shape
    output_dim, r_b = b_weight.shape
    assert r_b == r
    scaling = float(lora_alpha) / float(r)

    lead = x.shape[:-1]
    m = math.prod(lead) if lead else 1
    x2d = x.reshape(m, input_dim)

    out_dtype = x.dtype
    cdtype = jnp.dtype(compute_dtype) if compute_dtype is not None else jnp.dtype(x.dtype)
    dbytes = cdtype.itemsize

    # Pad rank only to the compute dtype's sublane multiple (8 f32 / 16 bf16),
    # not 128: keeps resident A^T / B^T and the h scratch small.
    sub = max(8, 32 // dbytes)
    r_p = _round_up(max(r, 1), sub)

    # Generation-aware VMEM budget (v7x: 64 MiB per TC; v5e/v6e: 128 MiB).
    try:
        cap = getattr(pltpu.get_tpu_info(), "vmem_capacity_bytes", None)
    except Exception:
        cap = None
    if not cap:
        cap = 64 << 20
    budget = max(32 << 20, min((int(cap) * 5) // 8, 100 << 20))
    headroom = 4 << 20

    # Clamp tiles to the problem size, then shrink until the estimate fits.
    tn = max(128, min(_round_up(tn, 128), _round_up(output_dim, 128)))
    tm = max(8, min(_round_up(tm, 8), _round_up(m, 8)))

    def _vmem_est(tm_, tn_):
        n_pad = _round_up(output_dim, tn_)
        return (2 * tm_ * input_dim * dbytes        # x tile (double-buffered)
                + 2 * tm_ * tn_ * dbytes            # out tile (double-buffered)
                + 2 * input_dim * r_p * dbytes      # resident A^T
                + 2 * r_p * n_pad * dbytes          # resident B^T
                + tm_ * r_p * dbytes                # h scratch
                + tm_ * tn_ * 4 + tm_ * r_p * 4)    # f32 temporaries

    while tm > 8 and _vmem_est(tm, tn) + headroom > budget:
        tm = max(8, _round_up(tm // 2, 8))
    while tn > 128 and _vmem_est(tm, tn) + headroom > budget:
        tn = max(128, _round_up(tn // 2, 128))

    grid_m = _cdiv(m, tm)
    grid_n = _cdiv(output_dim, tn)
    n_p = grid_n * tn

    vmem_limit = int(min(max(_vmem_est(tm, tn) + headroom, 32 << 20), budget))

    # Tiny weight tensors only: fold scaling into A^T, zero-pad rank on both
    # operands and B^T's N so the in-kernel column slice is always in bounds.
    x_c = x2d.astype(cdtype)
    a_t = (a_weight.T.astype(jnp.float32) * scaling).astype(cdtype)
    b_t = b_weight.T.astype(cdtype)
    if r_p != r:
        a_t = jnp.pad(a_t, ((0, 0), (0, r_p - r)))
        b_t = jnp.pad(b_t, ((0, r_p - r), (0, 0)))
    if n_p != output_dim:
        b_t = jnp.pad(b_t, ((0, 0), (0, n_p - output_dim)))

    if grid_m == 1:
        # Decode / small-M path: first matmul is tiny -> plain XLA; the Pallas
        # kernel tiles only N with a fully parallel grid (megacore-friendly).
        h = jnp.dot(x_c, a_t, preferred_element_type=jnp.float32).astype(cdtype)
        cost = pl.CostEstimate(
            flops=2 * m * r_p * output_dim,
            transcendentals=0,
            bytes_accessed=(m * r_p + r_p * n_p + m * output_dim) * dbytes,
        )
        out2d = pl.pallas_call(
            _lora_apply_b_kernel,
            out_shape=jax.ShapeDtypeStruct((m, output_dim), out_dtype),
            grid_spec=pltpu.PrefetchScalarGridSpec(
                num_scalar_prefetch=0,
                grid=(grid_n,),
                in_specs=[
                    pl.BlockSpec((m, r_p), lambda j: (0, 0)),    # h resident
                    pl.BlockSpec((r_p, tn), lambda j: (0, j)),   # B^T column tile
                ],
                out_specs=pl.BlockSpec((m, tn), lambda j: (0, j)),
            ),
            compiler_params=pltpu.CompilerParams(
                dimension_semantics=("parallel",),
                vmem_limit_bytes=vmem_limit,
            ),
            cost_estimate=cost,
        )(h, b_t)
    else:
        cost = pl.CostEstimate(
            flops=2 * m * r * (input_dim + output_dim),
            transcendentals=0,
            bytes_accessed=(m * (input_dim + output_dim)
                            + r_p * (input_dim + n_p)) * dbytes,
        )
        out2d = pl.pallas_call(
            _lora_kernel,
            out_shape=jax.ShapeDtypeStruct((m, output_dim), out_dtype),
            grid_spec=pltpu.PrefetchScalarGridSpec(
                num_scalar_prefetch=0,
                grid=(grid_m, grid_n),
                in_specs=[
                    pl.BlockSpec((tm, input_dim), lambda i, j: (i, 0)),   # x tile (held over j)
                    pl.BlockSpec((input_dim, r_p), lambda i, j: (0, 0)),  # A^T resident
                    pl.BlockSpec((r_p, n_p), lambda i, j: (0, 0)),        # B^T resident
                ],
                out_specs=pl.BlockSpec((tm, tn), lambda i, j: (i, j)),
                scratch_shapes=[pltpu.VMEM((tm, r_p), cdtype)],           # h cache
            ),
            compiler_params=pltpu.CompilerParams(
                # N axis must be "arbitrary": the h scratch is filled at j == 0
                # and reused for j > 0.  M stays "parallel" for megacore.
                dimension_semantics=("parallel", "arbitrary"),
                vmem_limit_bytes=vmem_limit,
            ),
            cost_estimate=cost,
        )(x_c, a_t, b_t)

    return out2d.reshape(*lead, output_dim)


if __name__ == "__main__":
    key = jax.random.PRNGKey(0)
    kx, ka, kb = jax.random.split(key, 3)

    batch, seq, input_dim = 2, 8, 32
    r, output_dim = 4, 32
    lora_alpha = 8.0

    x = jax.random.normal(kx, (batch, seq, input_dim), dtype=jnp.float32)
    # nn.Linear default init for lora_A; the module zero-inits lora_B, but a
    # random B makes the numerical check non-trivial (zero-init tested below).
    bound_a = 1.0 / (input_dim ** 0.5)
    a_weight = jax.random.uniform(ka, (r, input_dim), minval=-bound_a,
                                  maxval=bound_a, dtype=jnp.float32)
    b_weight = 0.02 * jax.random.normal(kb, (output_dim, r), dtype=jnp.float32)

    def ref_lora(xv, aw, bw, alpha):
        scale = alpha / aw.shape[0]
        h = jnp.einsum("...k,rk->...r", xv, aw, precision="highest")
        return jnp.einsum("...r,nr->...n", h, bw, precision="highest") * scale

    ref = ref_lora(x, a_weight, b_weight, lora_alpha)

    # 1) Default tiling -> single M tile -> decode path.
    out = jax.block_until_ready(
        lora_forward(x, a_weight, b_weight, lora_alpha=lora_alpha))
    assert out.shape == (batch, seq, output_dim)
    assert jnp.allclose(out, ref, atol=1e-3, rtol=1e-3)

    # 2) Multi-tile M -> main path exercising the h-cache (N axis arbitrary).
    out_tiled = jax.block_until_ready(
        lora_forward(x, a_weight, b_weight, lora_alpha=lora_alpha, tm=8, tn=128))
    assert jnp.allclose(out_tiled, ref, atol=1e-3, rtol=1e-3)

    # 3) Ragged M/N/K: partial boundary tiles on both grid axes, padded rank.
    m2, k2, n2, r2 = 40, 160, 320, 8
    x2 = jax.random.normal(kx, (m2, k2), dtype=jnp.float32)
    a2 = jax.random.uniform(ka, (r2, k2), minval=-0.1, maxval=0.1,
                            dtype=jnp.float32)
    b2 = 0.02 * jax.random.normal(kb, (n2, r2), dtype=jnp.float32)
    ref2 = ref_lora(x2, a2, b2, lora_alpha)
    out2 = jax.block_until_ready(
        lora_forward(x2, a2, b2, lora_alpha=lora_alpha, tm=16, tn=128))
    assert jnp.allclose(out2, ref2, atol=1e-3, rtol=1e-3)

    # 4) Decode path with a multi-tile N grid (single M tile, ragged N).
    out3 = jax.block_until_ready(
        lora_forward(x2, a2, b2, lora_alpha=lora_alpha, tm=64, tn=128))
    assert jnp.allclose(out3, ref2, atol=1e-3, rtol=1e-3)

    # 5) bf16 compute fast path (f32 accumulation inside the kernel).
    out_bf16 = jax.block_until_ready(
        lora_forward(x2, a2, b2, lora_alpha=lora_alpha,
                     compute_dtype=jnp.bfloat16, tm=16, tn=128))
    assert out_bf16.dtype == x2.dtype
    assert jnp.allclose(out_bf16, ref2, atol=2e-2, rtol=2e-2)

    # 6) The module's literal zero-init of lora_B must give exact zeros.
    out_zero = jax.block_until_ready(
        lora_forward(x, a_weight, jnp.zeros_like(b_weight),
                     lora_alpha=lora_alpha))
    assert jnp.allclose(out_zero, jnp.zeros_like(out_zero))

    print("KERNEL_OK")
</pallas_src>

<mosaic_0001>
module attributes {stable_mosaic.version = 11 : i64} {
  func.func @_lora_apply_b_kernel(%arg0: i32, %arg1: memref<16x8xf32, #tpu.memory_space<vmem>>, %arg2: memref<8x128xf32, #tpu.memory_space<vmem>>, %arg3: memref<16x128xf32, #tpu.memory_space<vmem>>) attributes {dimension_semantics = [#tpu.dimension_semantics<parallel>], iteration_bounds = array<i64: 1>, scalar_prefetch = 0 : i64, scratch_operands = 0 : i64, tpu.core_type = #tpu.core_type<tc>, window_params = [{pipeline_mode = #tpu.pipeline_mode<synchronous>, transform_indices = @transform_0, window_bounds = array<i64: 16, 8>}, {transform_indices = @transform_1, window_bounds = array<i64: 8, 128>}, {transform_indices = @transform_2, window_bounds = array<i64: 16, 128>}]} {
    %c0 = arith.constant 0 : index
    %c0_0 = arith.constant 0 : index
    %0 = vector.load %arg1[%c0, %c0_0] : memref<16x8xf32, #tpu.memory_space<vmem>>, vector<16x8xf32>
    %c0_1 = arith.constant 0 : index
    %c0_2 = arith.constant 0 : index
    %1 = vector.load %arg2[%c0_1, %c0_2] : memref<8x128xf32, #tpu.memory_space<vmem>>, vector<8x128xf32>
    %cst = arith.constant dense<0.000000e+00> : vector<16x128xf32>
    %2 = tpu.matmul %0, %1, %cst {dimension_numbers = #tpu.dot_dimension_numbers<[1], [0], [0], [1], [0, 0, 1, 1], [], []>} : vector<16x8xf32>, vector<8x128xf32>, vector<16x128xf32> -> vector<16x128xf32>
    %c0_3 = arith.constant 0 : index
    %c0_4 = arith.constant 0 : index
    %3 = vector.load %arg3[%c0_3, %c0_4] : memref<16x128xf32, #tpu.memory_space<vmem>>, vector<16x128xf32>
    tpu.vector_store %arg3[%c0_3, %c0_4], %2 {strides = array<i32>} : memref<16x128xf32, #tpu.memory_space<vmem>>, vector<16x128xf32>,
    return
  }
  func.func @transform_0(%arg0: i32) -> (i32, i32) {
    %c0_i32 = arith.constant 0 : i32
    %c0_i32_0 = arith.constant 0 : i32
    %c0_i32_1 = arith.constant 0 : i32
    return %c0_i32, %c0_i32_0 : i32, i32
  }
  func.func @transform_1(%arg0: i32) -> (i32, i32) {
    %c0_i32 = arith.constant 0 : i32
    %c0_i32_0 = arith.constant 0 : i32
    return %c0_i32, %arg0 : i32, i32
  }
  func.func @transform_2(%arg0: i32) -> (i32, i32) {
    %c0_i32 = arith.constant 0 : i32
    %c0_i32_0 = arith.constant 0 : i32
    return %c0_i32, %arg0 : i32, i32
  }
}

</mosaic_0001>

<llo_original>
// kernel: tpu_custom_call.1
$region0: #{tpu_custom_call.1}
  #allocation0 [shape = 'u32[]', space=smem, size = 0x4, offset = 0x4, fixed_abs, tag = 'smem constant byte address 0x4 - core index']
  #allocation1 [shape = 'u32[144,128]{1,0:T(1,128)}', space=vmem, size = 0x12000, scoped, tag = 'internal scratch']
  %s0 = inlined_call_operand.vmem [shape: f32[16,8], index: 0, kind: input, shape index: {}]
  %s1 = inlined_call_operand.vmem [shape: f32[8,128], index: 1, kind: input, shape index: {}]
  %s2 = inlined_call_operand.hbm [shape: f32[16,32], index: 2, kind: output, shape index: {}]
  %s3 = sld [smem:[#allocation0]]
  $region18: #{tpu_custom_call.1} parent=0
    _
  %s5 = ssub.s32 1, %s3
  %s6 = scalar_select 0, %s5, %s3
  $region1: #{tpu_custom_call.1} parent=0
    #allocation2 [shape = 'u8[8192]{0}', space=vmem, size = 0x2000, scoped, tag = 'output window, operand 0, single buffered']
    #allocation3 [shape = 's32[1]{0}', space=sflag, size = 0x4, scoped, tag = 'scoped memory for tpu_custom_call.1']
    %7 = vsyncpa [#allocation3], 0
    // Predicated region
    $region2: #{tpu_custom_call.1} parent=1 // pred_check
      _
    $region3: #{tpu_custom_call.1} parent=1 // pred_check_branch
      %9 = sbr.rel (0) target = $region5
    $region4: #{tpu_custom_call.1} parent=1 // pred_region
      _
    $region5: #{tpu_custom_call.1} parent=1 // pred_fallthru
      _
    // Predicated region
    $region6: #{tpu_custom_call.1} parent=1 // pred_check
      _
    $region7: #{tpu_custom_call.1} parent=1 // pred_check_branch
      %11 = sbr.rel (0) target = $region9
    $region8: #{tpu_custom_call.1} parent=1 // pred_region
      _
    $region9: #{tpu_custom_call.1} parent=1 // pred_fallthru
      _
    %v12 = vld [vmem:[%s0] sm:$0xff]
    %v13 = vld [vmem:[%s0 + $0x8] sm:$0xff]
    %v14 = vld [vmem:[%s1] sm:$0xff]
    %vm15 = vcmask 64512
    %v17 = vsel %vm15, %v12, 0
    %v20 = vsel %vm15, %v13, 0
    %22 = vmatprep.subr.mxu0 0.0
    %23 = vmatpush1.msra.mxu0 0.0
    %24 = vmatprep.subr.mxu0 0.0
    %25 = vmatpush1.msra.mxu0 0.0
    %26 = vmatprep.subr.mxu0 0.0
    %27 = vmatpush1.msra.mxu0 0.0
    %28 = vmatprep.subr.mxu0 0.0
    %29 = vmatpush1.msra.mxu0 0.0
    %30 = vmatprep.subr.mxu0 0.0
    %31 = vmatpush1.msra.mxu0 0.0
    %32 = vmatprep.subr.mxu0 0.0
    %33 = vmatpush1.msra.mxu0 0.0
    %34 = vmatprep.subr.mxu0 0.0
    %35 = vmatpush1.msra.mxu0 0.0
    %36 = vmatprep.subr.mxu0 0.0
    %37 = vmatpush1.msra.mxu0 0.0
    %38 = vmatprep.subr.mxu0 0.0
    %39 = vmatpush1.msra.mxu0 0.0
    %40 = vmatprep.subr.mxu0 0.0
    %41 = vmatpush1.msra.mxu0 0.0
    %42 = vmatprep.subr.mxu0 0.0
    %43 = vmatpush1.msra.mxu0 0.0
    %44 = vmatprep.subr.mxu0 0.0
    %45 = vmatpush1.msra.mxu0 0.0
    %46 = vmatprep.subr.mxu0 0.0
    %47 = vmatpush1.msra.mxu0 0.0
    %48 = vmatprep.subr.mxu0 0.0
    %49 = vmatpush1.msra.mxu0 0.0
    %50 = vmatprep.subr.mxu0 0.0
    %51 = vmatpush1.msra.mxu0 0.0
    %52 = vmatprep.subr.mxu0 0.0
    %53 = vmatpush1.msra.mxu0 %v14
    %54 = vmatprep.subr.mxu0 0.0
    %55 = vmatpush2.msra.mxu0 0.0
    %56 = vmatprep.subr.mxu0 0.0
    %57 = vmatpush2.msra.mxu0 0.0
    %58 = vmatprep.subr.mxu0 0.0
    %59 = vmatpush2.msra.mxu0 0.0
    %60 = vmatprep.subr.mxu0 0.0
    %61 = vmatpush2.msra.mxu0 0.0
    %62 = vmatprep.subr.mxu0 0.0
    %63 = vmatpush2.msra.mxu0 0.0
    %64 = vmatprep.subr.mxu0 0.0
    %65 = vmatpush2.msra.mxu0 0.0
    %66 = vmatprep.subr.mxu0 0.0
    %67 = vmatpush2.msra.mxu0 0.0
    %68 = vmatprep.subr.mxu0 0.0
    %69 = vmatpush2.msra.mxu0 0.0
    %70 = vmatprep.subr.mxu0 0.0
    %71 = vmatpush2.msra.mxu0 0.0
    %72 = vmatprep.subr.mxu0 0.0
    %73 = vmatpush2.msra.mxu0 0.0
    %74 = vmatprep.subr.mxu0 0.0
    %75 = vmatpush2.msra.mxu0 0.0
    %76 = vmatprep.subr.mxu0 0.0
    %77 = vmatpush2.msra.mxu0 0.0
    %78 = vmatprep.subr.mxu0 0.0
    %79 = vmatpush2.msra.mxu0 0.0
    %80 = vmatprep.subr.mxu0 0.0
    %81 = vmatpush2.msra.mxu0 0.0
    %82 = vmatprep.subr.mxu0 0.0
    %83 = vmatpush2.msra.mxu0 0.0
    %84 = vmatprep.subr.mxu0 0.0
    %85 = vmatpush2.msra.mxu0 0.0
    %86 = vmatprep.mubr.f32.mxu0 0.0
    %87 = vmatmul.mubr.f32.gmra.mxu0 %v17
    %v88 = vpop.f32.mrf.mxu0
    %v89 = vadd.f32 0.0, %v88
    %v90 = vpop.f32.mrf.mxu0
    %91 = vmatprep.mubr.f32.mxu0 0.0
    %92 = vmatmul.mubr.f32.gmra.mxu0 %v20
    %v93 = vpop.f32.mrf.mxu0
    %v94 = vadd.f32 0.0, %v93
    %v95 = vpop.f32.mrf.mxu0
    %96 = vdwg.mxu0
    %97 = vst [vmem:[#allocation2] sm:$0xff] %v89
    %98 = vst [vmem:[#allocation2 + $0x8] sm:$0xff] %v94
    // Predicated region
    $region10: #{tpu_custom_call.1} parent=1 // pred_check
      _
    $region11: #{tpu_custom_call.1} parent=1 // pred_check_branch
      %100 = sbr.rel (0) target = $region13
    $region12: #{tpu_custom_call.1} parent=1 // pred_region
      %s102 = ssub.s32 256, 256
      %103 = vsyncadd [#allocation3], %s102
      %s104 = sshll.u32 [#allocation2], 4
      %s105 = int_to_ptr.vmem [resolvable:$true] %s104
      %110 = dma.vmem_to_hbm [thread:$0]  %s105, 256, %s2, [#allocation3], 128, 128, 8
    $region13: #{tpu_custom_call.1} parent=1 // pred_fallthru
      _
    // Predicated region
    $region14: #{tpu_custom_call.1} parent=1 // pred_check
      _
    $region15: #{tpu_custom_call.1} parent=1 // pred_check_branch
      %112 = sbr.rel (0) target = $region17
    $region16: #{tpu_custom_call.1} parent=1 // pred_region
      %113 = dma.done [#allocation3], 256
    $region17: #{tpu_custom_call.1} parent=1 // pred_fallthru
      _
    %114 = vsyncpa [#allocation3], 1

</llo_original>
